<compile_context>
chip_gen: v6e
topology: v6e:2x2x1
jax: 0.10.0
libtpu: 0.0.40
codegen_flags: <defaults>
</compile_context>

<pallas_src>
import functools

import jax
import jax.numpy as jnp
from jax.experimental import pallas as pl
from jax.experimental.pallas import tpu as pltpu

LN_EPS = 1e-5  # torch.nn.LayerNorm default


def _round_up(a, b):
    return (a + b - 1) // b * b


def _ffn_kernel(x_ref, w0_ref, b0_ref, w1_ref, b1_ref, g_ref, beta_ref,
                o_ref, acc_ref, *, e_real):
    """One (row-tile, F-chunk) grid step.

    x_ref  : (tm, e_pad)   input tile (resident across the F axis)
    w0_ref : (e_pad, tf)   fc0 weight chunk
    b0_ref : (1, tf)       fc0 bias chunk
    w1_ref : (tf, e_pad)   fc1 weight chunk
    b1/g/beta : (1, e_pad)
    o_ref  : (tm, e_pad)   output tile (written on the last F chunk only)
    acc_ref: (tm, e_pad)   f32 accumulator scratch
    """
    j = pl.program_id(1)

    x = x_ref[...]

    # fc0 chunk + bias + ReLU (dropout0 = identity at inference).  Only one
    # (tm, tf) f32 chunk of the hidden activation is live at a time.
    h = jnp.dot(x, w0_ref[...], preferred_element_type=jnp.float32)
    h = jnp.maximum(h + b0_ref[...].astype(jnp.float32), 0.0)

    # fc1 partial product for this F chunk; MXU operands stay in their native
    # dtype, accumulation is f32.
    part = jnp.dot(h.astype(w1_ref.dtype), w1_ref[...],
                   preferred_element_type=jnp.float32)

    @pl.when(j == 0)
    def _():
        acc_ref[...] = part

    @pl.when(j > 0)
    def _():
        acc_ref[...] += part

    # Epilogue on the last F chunk: fc1 bias, residual add, LayerNorm.
    @pl.when(j == pl.num_programs(1) - 1)
    def _():
        z = acc_ref[...] + b1_ref[...].astype(jnp.float32) + x.astype(jnp.float32)
        # One-pass LayerNorm statistics over the *real* embedding width.
        # Padded E lanes of z are exactly zero (zero-padded x / weights /
        # biases), so no mask is needed for either sum.
        inv_e = 1.0 / e_real
        mean = jnp.sum(z, axis=-1, keepdims=True) * inv_e
        msq = jnp.sum(z * z, axis=-1, keepdims=True) * inv_e
        var = jnp.maximum(msq - mean * mean, 0.0)
        zn = (z - mean) * jax.lax.rsqrt(var + LN_EPS)
        out = zn * g_ref[...].astype(jnp.float32) + beta_ref[...].astype(jnp.float32)
        o_ref[...] = out.astype(o_ref.dtype)


def _vmem_capacity_bytes():
    """Physical VMEM per TensorCore (128 MiB v5e/v6e, 64 MiB v7x)."""
    try:
        cap = getattr(pltpu.get_tpu_info(), "vmem_capacity_bytes", None)
        if cap:
            return int(cap)
    except Exception:
        pass
    return 64 << 20  # conservative fallback (v7x)


def _choose_tiles(rows, e_pad, f_pad, x_itemsize, w_itemsize, tile_rows, cap):
    """Pick (tm, tf, vmem_limit_bytes) that fit the real VMEM budget."""
    budget = max(cap - (12 << 20), cap // 2)  # headroom for compiler scratch

    def est(tm, tf):
        e = 2 * tm * e_pad * x_itemsize                 # x tile (2 bufs)
        e += 2 * tm * e_pad * x_itemsize                # out tile (2 bufs)
        e += 2 * e_pad * tf * w_itemsize                # w0 chunk (2 bufs)
        e += 2 * tf * e_pad * w_itemsize                # w1 chunk (2 bufs)
        e += 2 * 8 * (tf + 3 * e_pad) * w_itemsize      # biases/gamma/beta
        e += tm * e_pad * 4                             # f32 accumulator
        e += tm * tf * 4 + 3 * tm * e_pad * 4           # live f32 intermediates
        return e

    # tm: multiple of 8, <= tile_rows; keep >= 2 row tiles when possible so the
    # "parallel" axis can shard across both v7x TensorCores.
    tm = min(_round_up(int(tile_rows), 8), _round_up(rows, 8))
    if rows >= 16:
        tm = min(tm, _round_up((rows + 1) // 2, 8))
    tm = max(tm, 8)

    # tf: largest multiple of 128 that divides f_pad and fits the budget.
    tf_candidates = [m * 128 for m in range(f_pad // 128, 0, -1)
                     if f_pad % (m * 128) == 0]
    while True:
        tf = next((t for t in tf_candidates if est(tm, t) <= budget),
                  tf_candidates[-1])
        if est(tm, tf) <= budget or tm <= 8:
            break
        tm = max(8, _round_up(tm // 2, 8))

    vmem_limit = int(min(cap, max(2 * est(tm, tf) + (4 << 20), 32 << 20)))
    return tm, tf, vmem_limit


@functools.partial(jax.jit, static_argnames=("tm", "tf", "vmem_limit"))
def _ffn_impl(x, w0, b0, w1, b1, gamma, beta, *, tm, tf, vmem_limit):
    B, S, E = x.shape
    F = w0.shape[1]
    rows = B * S
    e_pad = _round_up(E, 128)
    f_pad = _round_up(F, 128)

    # Lane-dense E/F only when needed (no-op for multiples of 128); rows are
    # NOT padded -- the ragged last row tile is handled by Pallas.
    x2 = x.reshape(rows, E)
    if e_pad != E:
        x2 = jnp.pad(x2, ((0, 0), (0, e_pad - E)))
    if e_pad != E or f_pad != F:
        w0p = jnp.pad(w0, ((0, e_pad - E), (0, f_pad - F)))
        w1p = jnp.pad(w1, ((0, f_pad - F), (0, e_pad - E)))
    else:
        w0p, w1p = w0, w1
    b0p = (jnp.pad(b0, (0, f_pad - F)) if f_pad != F else b0).reshape(1, f_pad)
    b1p = (jnp.pad(b1, (0, e_pad - E)) if e_pad != E else b1).reshape(1, e_pad)
    gp = (jnp.pad(gamma, (0, e_pad - E)) if e_pad != E else gamma).reshape(1, e_pad)
    betap = (jnp.pad(beta, (0, e_pad - E)) if e_pad != E else beta).reshape(1, e_pad)

    grid = ((rows + tm - 1) // tm, f_pad // tf)

    isz = x.dtype.itemsize
    wsz = w0.dtype.itemsize
    cost = pl.CostEstimate(
        flops=int(4 * rows * e_pad * f_pad),                 # two matmuls
        transcendentals=int(rows),                            # rsqrt per row
        bytes_accessed=int(2 * rows * e_pad * isz
                           + 2 * e_pad * f_pad * wsz
                           + (f_pad + 3 * e_pad) * wsz))

    kernel = functools.partial(_ffn_kernel, e_real=E)

    out = pl.pallas_call(
        kernel,
        out_shape=jax.ShapeDtypeStruct((rows, e_pad), x.dtype),
        grid_spec=pltpu.PrefetchScalarGridSpec(
            num_scalar_prefetch=0,
            grid=grid,
            in_specs=[
                pl.BlockSpec((tm, e_pad), lambda i, j: (i, 0)),   # x tile
                pl.BlockSpec((e_pad, tf), lambda i, j: (0, j)),   # w0 chunk
                pl.BlockSpec((1, tf),     lambda i, j: (0, j)),   # b0 chunk
                pl.BlockSpec((tf, e_pad), lambda i, j: (j, 0)),   # w1 chunk
                pl.BlockSpec((1, e_pad),  lambda i, j: (0, 0)),   # b1
                pl.BlockSpec((1, e_pad),  lambda i, j: (0, 0)),   # gamma
                pl.BlockSpec((1, e_pad),  lambda i, j: (0, 0)),   # beta
            ],
            out_specs=pl.BlockSpec((tm, e_pad), lambda i, j: (i, 0)),
            scratch_shapes=[pltpu.VMEM((tm, e_pad), jnp.float32)],
        ),
        compiler_params=pltpu.CompilerParams(
            dimension_semantics=("parallel", "arbitrary"),
            vmem_limit_bytes=vmem_limit),
        cost_estimate=cost,
    )(x2, w0p, b0p, w1p, b1p, gp, betap)

    if e_pad != E:
        out = out[:, :E]
    return out.reshape(B, S, E)


def position_wise_feed_forward(x, w0, b0, w1, b1, gamma, beta, *,
                               tile_rows=256):
    """Inference-mode PositionWiseFeedForward.

    x: (B, S, E); w0: (E, F); b0: (F,); w1: (F, E); b1: (E,);
    gamma/beta: (E,). Returns (B, S, E) in x.dtype.
    """
    B, S, E = x.shape
    F = w0.shape[1]
    rows = B * S
    e_pad = _round_up(E, 128)
    f_pad = _round_up(F, 128)
    cap = _vmem_capacity_bytes()
    tm, tf, vmem_limit = _choose_tiles(rows, e_pad, f_pad,
                                       x.dtype.itemsize, w0.dtype.itemsize,
                                       tile_rows, cap)
    return _ffn_impl(x, w0, b0, w1, b1, gamma, beta,
                     tm=tm, tf=tf, vmem_limit=vmem_limit)


def _init_params(key, len_embedding, len_feedforward, dtype=jnp.float32):
    """torch.nn.Linear default init (U(-1/sqrt(fan_in), 1/sqrt(fan_in)));
    LayerNorm gamma=1, beta=0."""
    k0, k1, k2, k3 = jax.random.split(key, 4)
    bound0 = 1.0 / (len_embedding ** 0.5)
    bound1 = 1.0 / (len_feedforward ** 0.5)
    w0 = jax.random.uniform(k0, (len_embedding, len_feedforward), dtype,
                            minval=-bound0, maxval=bound0)
    b0 = jax.random.uniform(k1, (len_feedforward,), dtype,
                            minval=-bound0, maxval=bound0)
    w1 = jax.random.uniform(k2, (len_feedforward, len_embedding), dtype,
                            minval=-bound1, maxval=bound1)
    b1 = jax.random.uniform(k3, (len_embedding,), dtype,
                            minval=-bound1, maxval=bound1)
    gamma = jnp.ones((len_embedding,), dtype)
    beta = jnp.zeros((len_embedding,), dtype)
    return w0, b0, w1, b1, gamma, beta


def _reference(x, w0, b0, w1, b1, gamma, beta):
    x = x.astype(jnp.float32)
    w0, b0, w1, b1, gamma, beta = (a.astype(jnp.float32)
                                   for a in (w0, b0, w1, b1, gamma, beta))
    h = jnp.maximum(x @ w0 + b0, 0.0)
    y = h @ w1 + b1
    z = y + x
    mean = jnp.mean(z, axis=-1, keepdims=True)
    var = jnp.mean((z - mean) ** 2, axis=-1, keepdims=True)
    return (z - mean) * jax.lax.rsqrt(var + LN_EPS) * gamma + beta


if __name__ == "__main__":
    batch, seq, len_embedding, len_feedforward = 2, 8, 32, 64

    key = jax.random.PRNGKey(0)
    kx, kp = jax.random.split(key)
    x = jax.random.normal(kx, (batch, seq, len_embedding), jnp.float32)
    params = _init_params(kp, len_embedding, len_feedforward)

    # f32 path
    out = position_wise_feed_forward(x, *params)
    out = jax.block_until_ready(out)
    ref = _reference(x, *params)
    assert out.shape == (batch, seq, len_embedding)
    assert jnp.allclose(out, ref, atol=1e-4, rtol=1e-4), "f32 mismatch vs reference"

    # bf16 path (native-dtype MXU operands, f32 accumulation/epilogue)
    x_bf = x.astype(jnp.bfloat16)
    params_bf = tuple(p.astype(jnp.bfloat16) for p in params)
    out_bf = position_wise_feed_forward(x_bf, *params_bf)
    out_bf = jax.block_until_ready(out_bf)
    ref_bf = _reference(x_bf, *params_bf)
    assert out_bf.dtype == jnp.bfloat16
    assert jnp.allclose(out_bf.astype(jnp.float32), ref_bf,
                        atol=6e-2, rtol=6e-2), "bf16 mismatch vs reference"

    # Ragged-rows path (rows not a multiple of the row tile): exercises the
    # masked boundary write of the last row block.
    x_r = jax.random.normal(kx, (batch, 9, len_embedding), jnp.float32)
    out_r = jax.block_until_ready(position_wise_feed_forward(x_r, *params))
    ref_r = _reference(x_r, *params)
    assert jnp.allclose(out_r, ref_r, atol=1e-4, rtol=1e-4), \
        "ragged-rows mismatch vs reference"

    print("KERNEL_OK")
</pallas_src>

<mosaic_0001>
module attributes {stable_mosaic.version = 11 : i64} {
  func.func @_ffn_kernel(%arg0: i32, %arg1: i32, %arg2: memref<8x128xf32, #tpu.memory_space<vmem>>, %arg3: memref<128x128xf32, #tpu.memory_space<vmem>>, %arg4: memref<1x128xf32, #tpu.memory_space<vmem>>, %arg5: memref<128x128xf32, #tpu.memory_space<vmem>>, %arg6: memref<1x128xf32, #tpu.memory_space<vmem>>, %arg7: memref<1x128xf32, #tpu.memory_space<vmem>>, %arg8: memref<1x128xf32, #tpu.memory_space<vmem>>, %arg9: memref<8x128xf32, #tpu.memory_space<vmem>>, %arg10: memref<8x128xf32, #tpu.memory_space<vmem>>) attributes {dimension_semantics = [#tpu.dimension_semantics<parallel>, #tpu.dimension_semantics<arbitrary>], iteration_bounds = array<i64: 2, 1>, scalar_prefetch = 0 : i64, scratch_operands = 1 : i64, tpu.core_type = #tpu.core_type<tc>, window_params = [{transform_indices = @transform_0, window_bounds = array<i64: 8, 128>}, {transform_indices = @transform_1, window_bounds = array<i64: 128, 128>}, {transform_indices = @transform_2, window_bounds = array<i64: 1, 128>}, {transform_indices = @transform_3, window_bounds = array<i64: 128, 128>}, {pipeline_mode = #tpu.pipeline_mode<synchronous>, transform_indices = @transform_4, window_bounds = array<i64: 1, 128>}, {pipeline_mode = #tpu.pipeline_mode<synchronous>, transform_indices = @transform_5, window_bounds = array<i64: 1, 128>}, {pipeline_mode = #tpu.pipeline_mode<synchronous>, transform_indices = @transform_6, window_bounds = array<i64: 1, 128>}, {transform_indices = @transform_7, window_bounds = array<i64: 8, 128>}]} {
    %c0 = arith.constant 0 : index
    %c0_0 = arith.constant 0 : index
    %0 = vector.load %arg2[%c0, %c0_0] : memref<8x128xf32, #tpu.memory_space<vmem>>, vector<8x128xf32>
    %c0_1 = arith.constant 0 : index
    %c0_2 = arith.constant 0 : index
    %1 = vector.load %arg3[%c0_1, %c0_2] : memref<128x128xf32, #tpu.memory_space<vmem>>, vector<128x128xf32>
    %cst = arith.constant dense<0.000000e+00> : vector<8x128xf32>
    %2 = tpu.matmul %0, %1, %cst {dimension_numbers = #tpu.dot_dimension_numbers<[1], [0], [0], [1], [0, 0, 1, 1], [], []>} : vector<8x128xf32>, vector<128x128xf32>, vector<8x128xf32> -> vector<8x128xf32>
    %c0_3 = arith.constant 0 : index
    %c0_4 = arith.constant 0 : index
    %3 = vector.load %arg4[%c0_3, %c0_4] : memref<1x128xf32, #tpu.memory_space<vmem>>, vector<1x128xf32>
    %4 = vector.broadcast %3 : vector<1x128xf32> to vector<8x128xf32>
    %5 = arith.addf %2, %4 : vector<8x128xf32>
    %cst_5 = arith.constant 0.000000e+00 : f32
    %6 = vector.broadcast %cst_5 : f32 to vector<8x128xf32>
    %7 = arith.maximumf %5, %6 : vector<8x128xf32>
    %c0_6 = arith.constant 0 : index
    %c0_7 = arith.constant 0 : index
    %8 = vector.load %arg5[%c0_6, %c0_7] : memref<128x128xf32, #tpu.memory_space<vmem>>, vector<128x128xf32>
    %cst_8 = arith.constant dense<0.000000e+00> : vector<8x128xf32>
    %9 = tpu.matmul %7, %8, %cst_8 {dimension_numbers = #tpu.dot_dimension_numbers<[1], [0], [0], [1], [0, 0, 1, 1], [], []>} : vector<8x128xf32>, vector<128x128xf32>, vector<8x128xf32> -> vector<8x128xf32>
    %c0_i32 = arith.constant 0 : i32
    %10 = arith.cmpi eq, %arg1, %c0_i32 : i32
    %11 = arith.extui %10 : i1 to i32
    %c0_i32_9 = arith.constant 0 : i32
    %12 = arith.cmpi ne, %11, %c0_i32_9 : i32
    scf.if %12 {
      %c0_14 = arith.constant 0 : index
      %c0_15 = arith.constant 0 : index
      %19 = vector.load %arg10[%c0_14, %c0_15] : memref<8x128xf32, #tpu.memory_space<vmem>>, vector<8x128xf32>
      tpu.vector_store %arg10[%c0_14, %c0_15], %9 {strides = array<i32>} : memref<8x128xf32, #tpu.memory_space<vmem>>, vector<8x128xf32>,
    } else {
    }
    %c0_i32_10 = arith.constant 0 : i32
    %13 = arith.cmpi sgt, %arg1, %c0_i32_10 : i32
    %14 = arith.extui %13 : i1 to i32
    %c0_i32_11 = arith.constant 0 : i32
    %15 = arith.cmpi ne, %14, %c0_i32_11 : i32
    scf.if %15 {
      %c0_14 = arith.constant 0 : index
      %c0_15 = arith.constant 0 : index
      %19 = vector.load %arg10[%c0_14, %c0_15] : memref<8x128xf32, #tpu.memory_space<vmem>>, vector<8x128xf32>
      %20 = arith.addf %19, %9 : vector<8x128xf32>
      %c0_16 = arith.constant 0 : index
      %c0_17 = arith.constant 0 : index
      %21 = vector.load %arg10[%c0_16, %c0_17] : memref<8x128xf32, #tpu.memory_space<vmem>>, vector<8x128xf32>
      tpu.vector_store %arg10[%c0_16, %c0_17], %20 {strides = array<i32>} : memref<8x128xf32, #tpu.memory_space<vmem>>, vector<8x128xf32>,
    } else {
    }
    %c0_i32_12 = arith.constant 0 : i32
    %16 = arith.cmpi eq, %arg1, %c0_i32_12 : i32
    %17 = arith.extui %16 : i1 to i32
    %c0_i32_13 = arith.constant 0 : i32
    %18 = arith.cmpi ne, %17, %c0_i32_13 : i32
    scf.if %18 {
      %c0_14 = arith.constant 0 : index
      %c0_15 = arith.constant 0 : index
      %19 = vector.load %arg10[%c0_14, %c0_15] : memref<8x128xf32, #tpu.memory_space<vmem>>, vector<8x128xf32>
      %c0_16 = arith.constant 0 : index
      %c0_17 = arith.constant 0 : index
      %20 = vector.load %arg6[%c0_16, %c0_17] : memref<1x128xf32, #tpu.memory_space<vmem>>, vector<1x128xf32>
      %21 = vector.broadcast %20 : vector<1x128xf32> to vector<8x128xf32>
      %22 = arith.addf %19, %21 : vector<8x128xf32>
      %23 = arith.addf %22, %0 : vector<8x128xf32>
      %cst_18 = arith.constant dense<0.000000e+00> : vector<8xf32>
      %24 = vector.multi_reduction <add>, %23, %cst_18 [1] : vector<8x128xf32> to vector<8xf32>
      %25 = vector.shape_cast %24 : vector<8xf32> to vector<8x1xf32>
      %cst_19 = arith.constant 3.125000e-02 : f32
      %26 = vector.broadcast %cst_19 : f32 to vector<8x1xf32>
      %27 = arith.mulf %25, %26 : vector<8x1xf32>
      %28 = arith.mulf %23, %23 : vector<8x128xf32>
      %cst_20 = arith.constant dense<0.000000e+00> : vector<8xf32>
      %29 = vector.multi_reduction <add>, %28, %cst_20 [1] : vector<8x128xf32> to vector<8xf32>
      %30 = vector.shape_cast %29 : vector<8xf32> to vector<8x1xf32>
      %cst_21 = arith.constant 3.125000e-02 : f32
      %31 = vector.broadcast %cst_21 : f32 to vector<8x1xf32>
      %32 = arith.mulf %30, %31 : vector<8x1xf32>
      %33 = arith.mulf %27, %27 : vector<8x1xf32>
      %34 = arith.subf %32, %33 : vector<8x1xf32>
      %cst_22 = arith.constant 0.000000e+00 : f32
      %35 = vector.broadcast %cst_22 : f32 to vector<8x1xf32>
      %36 = arith.maximumf %34, %35 : vector<8x1xf32>
      %37 = vector.broadcast %27 : vector<8x1xf32> to vector<8x128xf32>
      %38 = arith.subf %23, %37 : vector<8x128xf32>
      %cst_23 = arith.constant 9.99999974E-6 : f32
      %39 = vector.broadcast %cst_23 : f32 to vector<8x1xf32>
      %40 = arith.addf %36, %39 : vector<8x1xf32>
      %41 = math.rsqrt %40 : vector<8x1xf32>
      %42 = vector.broadcast %41 : vector<8x1xf32> to vector<8x128xf32>
      %43 = arith.mulf %38, %42 : vector<8x128xf32>
      %c0_24 = arith.constant 0 : index
      %c0_25 = arith.constant 0 : index
      %44 = vector.load %arg7[%c0_24, %c0_25] : memref<1x128xf32, #tpu.memory_space<vmem>>, vector<1x128xf32>
      %45 = vector.broadcast %44 : vector<1x128xf32> to vector<8x128xf32>
      %46 = arith.mulf %43, %45 : vector<8x128xf32>
      %c0_26 = arith.constant 0 : index
      %c0_27 = arith.constant 0 : index
      %47 = vector.load %arg8[%c0_26, %c0_27] : memref<1x128xf32, #tpu.memory_space<vmem>>, vector<1x128xf32>
      %48 = vector.broadcast %47 : vector<1x128xf32> to vector<8x128xf32>
      %49 = arith.addf %46, %48 : vector<8x128xf32>
      %c0_28 = arith.constant 0 : index
      %c0_29 = arith.constant 0 : index
      %50 = vector.load %arg9[%c0_28, %c0_29] : memref<8x128xf32, #tpu.memory_space<vmem>>, vector<8x128xf32>
      tpu.vector_store %arg9[%c0_28, %c0_29], %49 {strides = array<i32>} : memref<8x128xf32, #tpu.memory_space<vmem>>, vector<8x128xf32>,
    } else {
    }
    return
  }
  func.func @transform_0(%arg0: i32, %arg1: i32) -> (i32, i32) {
    %c0_i32 = arith.constant 0 : i32
    %c0_i32_0 = arith.constant 0 : i32
    return %arg0, %c0_i32 : i32, i32
  }
  func.func @transform_1(%arg0: i32, %arg1: i32) -> (i32, i32) {
    %c0_i32 = arith.constant 0 : i32
    %c0_i32_0 = arith.constant 0 : i32
    return %c0_i32, %arg1 : i32, i32
  }
  func.func @transform_2(%arg0: i32, %arg1: i32) -> (i32, i32) {
    %c0_i32 = arith.constant 0 : i32
    %c0_i32_0 = arith.constant 0 : i32
    return %c0_i32, %arg1 : i32, i32
  }
  func.func @transform_3(%arg0: i32, %arg1: i32) -> (i32, i32) {
    %c0_i32 = arith.constant 0 : i32
    %c0_i32_0 = arith.constant 0 : i32
    return %arg1, %c0_i32 : i32, i32
  }
  func.func @transform_4(%arg0: i32, %arg1: i32) -> (i32, i32) {
    %c0_i32 = arith.constant 0 : i32
    %c0_i32_0 = arith.constant 0 : i32
    %c0_i32_1 = arith.constant 0 : i32
    return %c0_i32, %c0_i32_0 : i32, i32
  }
  func.func @transform_5(%arg0: i32, %arg1: i32) -> (i32, i32) {
    %c0_i32 = arith.constant 0 : i32
    %c0_i32_0 = arith.constant 0 : i32
    %c0_i32_1 = arith.constant 0 : i32
    return %c0_i32, %c0_i32_0 : i32, i32
  }
  func.func @transform_6(%arg0: i32, %arg1: i32) -> (i32, i32) {
    %c0_i32 = arith.constant 0 : i32
    %c0_i32_0 = arith.constant 0 : i32
    %c0_i32_1 = arith.constant 0 : i32
    return %c0_i32, %c0_i32_0 : i32, i32
  }
  func.func @transform_7(%arg0: i32, %arg1: i32) -> (i32, i32) {
    %c0_i32 = arith.constant 0 : i32
    %c0_i32_0 = arith.constant 0 : i32
    return %arg0, %c0_i32 : i32, i32
  }
}

</mosaic_0001>

<llo_original>
// kernel: _ffn_impl.1
$region0: #{_ffn_impl.1}
  #allocation0 [shape = 'u32[]', space=smem, size = 0x4, offset = 0x4, fixed_abs, tag = 'smem constant byte address 0x4 - core index']
  #allocation1 [shape = 'u32[144,128]{1,0:T(1,128)}', space=vmem, size = 0x12000, scoped, tag = 'internal scratch']
  #allocation2 [shape = 'f32[8,128]{1,0:T(8,128)}', space=vmem, size = 0x1000, scoped, tag = 'scratch operand']
  %s0 = inlined_call_operand.vmem [shape: f32[16,128], index: 0, kind: input, shape index: {}]
  %s1 = inlined_call_operand.vmem [shape: f32[128,128], index: 1, kind: input, shape index: {}]
  %s2 = inlined_call_operand.vmem [shape: f32[1,128], index: 2, kind: input, shape index: {}]
  %s3 = inlined_call_operand.vmem [shape: f32[128,128], index: 3, kind: input, shape index: {}]
  %s4 = inlined_call_operand.vmem [shape: f32[1,128], index: 4, kind: input, shape index: {}]
  %s5 = inlined_call_operand.vmem [shape: f32[1,128], index: 5, kind: input, shape index: {}]
  %s6 = inlined_call_operand.vmem [shape: f32[1,128], index: 6, kind: input, shape index: {}]
  %s7 = inlined_call_operand.vmem [shape: f32[16,128], index: 7, kind: output, shape index: {}]
  %s8 = sld [smem:[#allocation0]]
  $region73: #{_ffn_impl.1} parent=0
    _
  %s10 = ssub.s32 1, %s8
  %s11 = scalar_select 0, %s10, %s8
  loop: start=0, step=1, limit=4
  $region2: #{_ffn_impl.1} parent=0 // loop_pre_header
    _
  $region3: #{_ffn_impl.1} parent=0 // loop_header
    %s13 = sphi 0, %s17
    %p14 = scmp.ge.s32.totalorder %s13, 4
    %s20 = sphi 0, %s32
    %s21 = sphi 0, %s28
    %s22 = sphi 0, %s20
    %s23 = sphi 0, %s21
    %s24 = sphi 0, %s22
    %s25 = sphi 0, %s23
    %s35 = sphi 0, %s37
    %s38 = sphi 0, %s35
    %s39 = sphi 0, %s38
    %s55 = sphi 0, %s39
    %s61 = sphi 0, %s63
    %s64 = sphi 0, %s61
    %s65 = sphi 0, %s64
    %s81 = sphi 0, %s65
    %s87 = sphi 0, %s89
    %s90 = sphi 0, %s87
    %s91 = sphi 0, %s90
    %s107 = sphi 0, %s91
    %s113 = sphi 0, %s115
    %s116 = sphi 0, %s113
    %s117 = sphi 0, %s116
    %s133 = sphi 0, %s117
    %s137 = sphi 0, %s137
    %s139 = sphi 0, %s137
    %s140 = sphi 0, %s139
    %s154 = sphi 0, %s140
    %s158 = sphi 0, %s158
    %s160 = sphi 0, %s158
    %s161 = sphi 0, %s160
    %s175 = sphi 0, %s161
    %s179 = sphi 0, %s179
    %s181 = sphi 0, %s179
    %s182 = sphi 0, %s181
    %s196 = sphi 0, %s182
    %s202 = sphi 0, %s204
    %s205 = sphi 0, %s202
    %s206 = sphi 0, %s205
    %s222 = sphi 0, %s206
  $region4: #{_ffn_impl.1} parent=0 // loop_header_branch
    %16 = sbr.rel (%p14) target = $region8
  $region5: #{_ffn_impl.1} parent=0 // loop_body
    %s18 = ssub.s32 %s13, 1
    %s19 = ssub.s32 %s13, 2
    %s26 = sadd.s32 1, %s21
    %p27 = scmp.ge.s32.totalorder %s26, 1
    %s28 = scalar_select %p27, 0, %s26
    %s29 = sadd.s32 1, %s20
    %s30 = scalar_select %p27, %s29, %s20
    %p31 = scmp.ge.s32.totalorder %s30, 2
    %s32 = scalar_select %p31, 0, %s30
    %s33 = ssub.s32 %s20, %s32
    %p34 = scmp.eq.s32.totalorder %s33, 0
    %s36 = sadd.s32 %s35, 1
    %s37 = scalar_select %p34, %s35, %s36
    %p40 = pneg %p34
    %p41 = scmp.eq.s32.totalorder %s13, 1
    %p42 = por %p40, %p41
    %p43 = scmp.ne.s32.totalorder %s35, %s38
    %p44 = scmp.eq.s32.totalorder %s13, 0
    %p45 = por %p43, %p44
    %p46 = scmp.ne.s32.totalorder %s35, %s38
    %p47 = scmp.eq.s32.totalorder %s18, 1
    %p48 = por %p46, %p47
    %p49 = scmp.ne.s32.totalorder %s38, %s39
    %p50 = scmp.eq.s32.totalorder %s18, 0
    %p51 = por %p49, %p50
    %p52 = scmp.ne.s32.totalorder %s38, %s39
    %p53 = scmp.eq.s32.totalorder %s19, 1
    %p54 = por %p52, %p53
    %p56 = scmp.ne.s32.totalorder %s39, %s55
    %p57 = scmp.eq.s32.totalorder %s19, 0
    %p58 = por %p56, %p57
    %s59 = ssub.s32 %s21, %s28
    %p60 = scmp.eq.s32.totalorder %s59, 0
    %s62 = sadd.s32 %s61, 1
    %s63 = scalar_select %p60, %s61, %s62
    %p66 = pneg %p60
    %p67 = scmp.eq.s32.totalorder %s13, 1
    %p68 = por %p66, %p67
    %p69 = scmp.ne.s32.totalorder %s61, %s64
    %p70 = scmp.eq.s32.totalorder %s13, 0
    %p71 = por %p69, %p70
    %p72 = scmp.ne.s32.totalorder %s61, %s64
    %p73 = scmp.eq.s32.totalorder %s18, 1
    %p74 = por %p72, %p73
    %p75 = scmp.ne.s32.totalorder %s64, %s65
    %p76 = scmp.eq.s32.totalorder %s18, 0
    %p77 = por %p75, %p76
    %p78 = scmp.ne.s32.totalorder %s64, %s65
    %p79 = scmp.eq.s32.totalorder %s19, 1
    %p80 = por %p78, %p79
    %p82 = scmp.ne.s32.totalorder %s65, %s81
    %p83 = scmp.eq.s32.totalorder %s19, 0
    %p84 = por %p82, %p83
    %s85 = ssub.s32 %s21, %s28
    %p86 = scmp.eq.s32.totalorder %s85, 0
    %s88 = sadd.s32 %s87, 1
    %s89 = scalar_select %p86, %s87, %s88
    %p92 = pneg %p86
    %p93 = scmp.eq.s32.totalorder %s13, 1
    %p94 = por %p92, %p93
    %p95 = scmp.ne.s32.totalorder %s87, %s90
    %p96 = scmp.eq.s32.totalorder %s13, 0
    %p97 = por %p95, %p96
    %p98 = scmp.ne.s32.totalorder %s87, %s90
    %p99 = scmp.eq.s32.totalorder %s18, 1
    %p100 = por %p98, %p99
    %p101 = scmp.ne.s32.totalorder %s90, %s91
    %p102 = scmp.eq.s32.totalorder %s18, 0
    %p103 = por %p101, %p102
    %p104 = scmp.ne.s32.totalorder %s90, %s91
    %p105 = scmp.eq.s32.totalorder %s19, 1
    %p106 = por %p104, %p105
    %p108 = scmp.ne.s32.totalorder %s91, %s107
    %p109 = scmp.eq.s32.totalorder %s19, 0
    %p110 = por %p108, %p109
    %s111 = ssub.s32 %s21, %s28
    %p112 = scmp.eq.s32.totalorder %s111, 0
    %s114 = sadd.s32 %s113, 1
    %s115 = scalar_select %p112, %s113, %s114
    %p118 = pneg %p112
    %p119 = scmp.eq.s32.totalorder %s13, 1
    %p120 = por %p118, %p119
    %p121 = scmp.ne.s32.totalorder %s113, %s116
    %p122 = scmp.eq.s32.totalorder %s13, 0
    %p123 = por %p121, %p122
    %p124 = scmp.ne.s32.totalorder %s113, %s116
    %p125 = scmp.eq.s32.totalorder %s18, 1
    %p126 = por %p124, %p125
    %p127 = scmp.ne.s32.totalorder %s116, %s117
    %p128 = scmp.eq.s32.totalorder %s18, 0
    %p129 = por %p127, %p128
    %p130 = scmp.ne.s32.totalorder %s116, %s117
    %p131 = scmp.eq.s32.totalorder %s19, 1
    %p132 = por %p130, %p131
    %p134 = scmp.ne.s32.totalorder %s117, %s133
    %p135 = scmp.eq.s32.totalorder %s19, 0
    %p136 = por %p134, %p135
    %s138 = sadd.s32 %s137, 1
    %p141 = scmp.eq.s32.totalorder %s13, 1
    %p142 = scmp.ne.s32.totalorder %s137, %s139
    %p143 = scmp.eq.s32.totalorder %s13, 0
    %p144 = por %p142, %p143
    %p145 = scmp.ne.s32.totalorder %s137, %s139
    %p146 = scmp.eq.s32.totalorder %s18, 1
    %p147 = por %p145, %p146
    %p148 = scmp.ne.s32.totalorder %s139, %s140
    %p149 = scmp.eq.s32.totalorder %s18, 0
    %p150 = por %p148, %p149
    %p151 = scmp.ne.s32.totalorder %s139, %s140
    %p152 = scmp.eq.s32.totalorder %s19, 1
    %p153 = por %p151, %p152
    %p155 = scmp.ne.s32.totalorder %s140, %s154
    %p156 = scmp.eq.s32.totalorder %s19, 0
    %p157 = por %p155, %p156
    %s159 = sadd.s32 %s158, 1
    %p162 = scmp.eq.s32.totalorder %s13, 1
    %p163 = scmp.ne.s32.totalorder %s158, %s160
    %p164 = scmp.eq.s32.totalorder %s13, 0
    %p165 = por %p163, %p164
    %p166 = scmp.ne.s32.totalorder %s158, %s160
    %p167 = scmp.eq.s32.totalorder %s18, 1
    %p168 = por %p166, %p167
    %p169 = scmp.ne.s32.totalorder %s160, %s161
    %p170 = scmp.eq.s32.totalorder %s18, 0
    %p171 = por %p169, %p170
    %p172 = scmp.ne.s32.totalorder %s160, %s161
    %p173 = scmp.eq.s32.totalorder %s19, 1
    %p174 = por %p172, %p173
    %p176 = scmp.ne.s32.totalorder %s161, %s175
    %p177 = scmp.eq.s32.totalorder %s19, 0
    %p178 = por %p176, %p177
    %s180 = sadd.s32 %s179, 1
    %p183 = scmp.eq.s32.totalorder %s13, 1
    %p184 = scmp.ne.s32.totalorder %s179, %s181
    %p185 = scmp.eq.s32.totalorder %s13, 0
    %p186 = por %p184, %p185
    %p187 = scmp.ne.s32.totalorder %s179, %s181
    %p188 = scmp.eq.s32.totalorder %s18, 1
    %p189 = por %p187, %p188
    %p190 = scmp.ne.s32.totalorder %s181, %s182
    %p191 = scmp.eq.s32.totalorder %s18, 0
    %p192 = por %p190, %p191
    %p193 = scmp.ne.s32.totalorder %s181, %s182
    %p194 = scmp.eq.s32.totalorder %s19, 1
    %p195 = por %p193, %p194
    %p197 = scmp.ne.s32.totalorder %s182, %s196
    %p198 = scmp.eq.s32.totalorder %s19, 0
    %p199 = por %p197, %p198
    %s200 = ssub.s32 %s20, %s32
    %p201 = scmp.eq.s32.totalorder %s200, 0
    %s203 = sadd.s32 %s202, 1
    %s204 = scalar_select %p201, %s202, %s203
    %p207 = pneg %p201
    %p208 = scmp.eq.s32.totalorder %s13, 1
    %p209 = por %p207, %p208
    %p210 = scmp.ne.s32.totalorder %s202, %s205
    %p211 = scmp.eq.s32.totalorder %s13, 0
    %p212 = por %p210, %p211
    %p213 = scmp.ne.s32.totalorder %s202, %s205
    %p214 = scmp.eq.s32.totalorder %s18, 1
    %p215 = por %p213, %p214
    %p216 = scmp.ne.s32.totalorder %s205, %s206
    %p217 = scmp.eq.s32.totalorder %s18, 0
    %p218 = por %p216, %p217
    %p219 = scmp.ne.s32.totalorder %s205, %s206
    %p220 = scmp.eq.s32.totalorder %s19, 1
    %p221 = por %p219, %p220
    %p223 = scmp.ne.s32.totalorder %s206, %s222
    %p224 = scmp.eq.s32.totalorder %s19, 0
    %p225 = por %p223, %p224
    %p226 = scmp.le.s32.totalorder 1, %s13
    %p227 = scmp.lt.s32.totalorder %s13, 3
    %p228 = pnand %p226, %p227
    %p229 = pneg %p228
    // Predicated region
    $region9: #{_ffn_impl.1} parent=5 // pred_check
      _
    $region10: #{_ffn_impl.1} parent=5 // pred_check_branch
      %231 = sbr.rel (%p228) target = $region12
    $region11: #{_ffn_impl.1} parent=5 // pred_region
      %s232 = ssub.s32 %s13, 1
      // Predicated region
      $region13: #{_ffn_impl.1} parent=11 // pred_check
        %p233 = pneg %p77
      $region14: #{_ffn_impl.1} parent=11 // pred_check_branch
        %235 = sbr.rel (%p233) target = $region16
      $region15: #{_ffn_impl.1} parent=11 // pred_region
        %p236 = scmp.lt.s32.totalorder %s23, 0
        %s237 = scalar_select %p236, %s23, 0
        %s238 = smul.addr %s237, 8
        %s239 = scalar_lea.vmem %s1, %s238
      $region16: #{_ffn_impl.1} parent=11 // pred_fallthru
        _
      // Predicated region
      $region17: #{_ffn_impl.1} parent=11 // pred_check
        %p240 = pneg %p103
      $region18: #{_ffn_impl.1} parent=11 // pred_check_branch
        %242 = sbr.rel (%p240) target = $region20
      $region19: #{_ffn_impl.1} parent=11 // pred_region
        %p243 = scmp.lt.s32.totalorder %s23, 0
        %s244 = scalar_select %p243, %s23, 0
        %s245 = scalar_lea.vmem %s2, %s244
      $region20: #{_ffn_impl.1} parent=11 // pred_fallthru
        _
      // Predicated region
      $region21: #{_ffn_impl.1} parent=11 // pred_check
        %p246 = pneg %p129
      $region22: #{_ffn_impl.1} parent=11 // pred_check_branch
        %248 = sbr.rel (%p246) target = $region24
      $region23: #{_ffn_impl.1} parent=11 // pred_region
        %s249 = smul.u32 16, %s23
        %p250 = scmp.lt.s32.totalorder %s249, 15
        %s251 = scalar_select %p250, %s249, 15
        %s252 = smul.addr %s251, 8
        %s253 = scalar_lea.vmem %s3, %s252
        %s254 = smul.u32 16, %s23
      $region24: #{_ffn_impl.1} parent=11 // pred_fallthru
        _
      // Predicated region
      $region25: #{_ffn_impl.1} parent=11 // pred_check
        %p255 = pneg %p150
      $region26: #{_ffn_impl.1} parent=11 // pred_check_branch
        %257 = sbr.rel (%p255) target = $region28
      $region27: #{_ffn_impl.1} parent=11 // pred_region
        _
      $region28: #{_ffn_impl.1} parent=11 // pred_fallthru
        _
      // Predicated region
      $region29: #{_ffn_impl.1} parent=11 // pred_check
        %p258 = pneg %p171
      $region30: #{_ffn_impl.1} parent=11 // pred_check_branch
        %260 = sbr.rel (%p258) target = $region32
      $region31: #{_ffn_impl.1} parent=11 // pred_region
        _
      $region32: #{_ffn_impl.1} parent=11 // pred_fallthru
        _
      // Predicated region
      $region33: #{_ffn_impl.1} parent=11 // pred_check
        %p261 = pneg %p192
      $region34: #{_ffn_impl.1} parent=11 // pred_check_branch
        %263 = sbr.rel (%p261) target = $region36
      $region35: #{_ffn_impl.1} parent=11 // pred_region
        _
      $region36: #{_ffn_impl.1} parent=11 // pred_fallthru
        _
    $region12: #{_ffn_impl.1} parent=5 // pred_fallthru
      _
    %p264 = scmp.lt.s32.totalorder %s13, 2
    // Predicated region
    $region37: #{_ffn_impl.1} parent=5 // pred_check
      %p265 = pneg %p264
    $region38: #{_ffn_impl.1} parent=5 // pred_check_branch
      %267 = sbr.rel (%p265) target = $region40
    $region39: #{_ffn_impl.1} parent=5 // pred_region
      // Predicated region
      $region41: #{_ffn_impl.1} parent=39 // pred_check
        %p268 = pneg %p45
      $region42: #{_ffn_impl.1} parent=39 // pred_check_branch
        %270 = sbr.rel (%p268) target = $region44
      $region43: #{_ffn_impl.1} parent=39 // pred_region
        %p271 = scmp.lt.s32.totalorder %s20, 1
        %s272 = scalar_select %p271, %s20, 1
        %s273 = smul.addr %s272, 8
        %s274 = scalar_lea.vmem %s0, %s273
      $region44: #{_ffn_impl.1} parent=39 // pred_fallthru
        _
    $region40: #{_ffn_impl.1} parent=5 // pred_fallthru
      _
    %p275 = scmp.le.s32.totalorder 1, %s13
    %p276 = scmp.lt.s32.totalorder %s13, 3
    %p277 = pnand %p275, %p276
    %p278 = pneg %p277
    // Predicated region
    $region45: #{_ffn_impl.1} parent=5 // pred_check
      _
    $region46: #{_ffn_impl.1} parent=5 // pred_check_branch
      %280 = sbr.rel (%p277) target = $region48
    $region47: #{_ffn_impl.1} parent=5 // pred_region
      %s281 = ssub.s32 %s13, 1
      %p282 = scmp.lt.s32.totalorder %s22, 1
      %s283 = scalar_select %p282, %s22, 1
      %s284 = smul.addr %s283, 8
      %s285 = scalar_lea.vmem %s0, %s284
      %p286 = pneg %p51
      %p287 = pneg %p48
      %p288 = scmp.lt.s32.totalorder %s23, 0
      %s289 = scalar_select %p288, %s23, 0
      %s290 = smul.addr %s289, 8
      %s291 = scalar_lea.vmem %s1, %s290
      %p292 = pneg %p77
      %p293 = pneg %p74
      %p294 = scmp.lt.s32.totalorder %s23, 0
      %s295 = scalar_select %p294, %s23, 0
      %s296 = scalar_lea.vmem %s2, %s295
      %p297 = pneg %p103
      %p298 = pneg %p100
      %s299 = smul.u32 16, %s23
      %p300 = scmp.lt.s32.totalorder %s299, 15
      %s301 = scalar_select %p300, %s299, 15
      %s302 = smul.addr %s301, 8
      %s303 = scalar_lea.vmem %s3, %s302
      %p304 = pneg %p129
      %p305 = pneg %p126
      %p306 = pneg %p150
      %p307 = pneg %p147
      %p308 = pneg %p171
      %p309 = pneg %p168
      %p310 = pneg %p192
      %p311 = pneg %p189
      %p312 = pneg %p218
      %p313 = pneg %p215
      %p314 = scmp.lt.s32.totalorder %s22, 1
      %s315 = scalar_select %p314, %s22, 1
      %s316 = smul.addr %s315, 8
      %s317 = scalar_lea.vmem %s7, %s316
      %p318 = scmp.lt.s32.totalorder %s22, 1
      %s319 = scalar_select %p318, %s22, 1
      %s320 = smul.addr %s319, 8
      %s321 = scalar_lea.vmem %s0, %s320
      %p322 = scmp.lt.s32.totalorder %s23, 0
      %s323 = scalar_select %p322, %s23, 0
      %s324 = smul.addr %s323, 8
      %s325 = scalar_lea.vmem %s1, %s324
      %p326 = scmp.lt.s32.totalorder %s23, 0
      %s327 = scalar_select %p326, %s23, 0
      %s328 = scalar_lea.vmem %s2, %s327
      %s329 = smul.u32 16, %s23
      %p330 = scmp.lt.s32.totalorder %s329, 15
      %s331 = scalar_select %p330, %s329, 15
      %s332 = smul.addr %s331, 8
      %s333 = scalar_lea.vmem %s3, %s332
      %s334 = smul.u32 16, %s23
      %p335 = scmp.lt.s32.totalorder %s22, 1
      %s336 = scalar_select %p335, %s22, 1
      %s337 = smul.addr %s336, 8
      %s338 = scalar_lea.vmem %s7, %s337
      %v339 = vld [vmem:[%s321] sm:$0xff]
      %v340 = vld [vmem:[%s325] sm:$0xff]
      %v341 = vld [vmem:[%s325 + $0x8] sm:$0xff]
      %v342 = vld [vmem:[%s325 + $0x10] sm:$0xff]
      %v343 = vld [vmem:[%s325 + $0x18] sm:$0xff]
      %v344 = vld [vmem:[%s325 + $0x20] sm:$0xff]
      %v345 = vld [vmem:[%s325 + $0x28] sm:$0xff]
      %v346 = vld [vmem:[%s325 + $0x30] sm:$0xff]
      %v347 = vld [vmem:[%s325 + $0x38] sm:$0xff]
      %v348 = vld [vmem:[%s325 + $0x40] sm:$0xff]
      %v349 = vld [vmem:[%s325 + $0x48] sm:$0xff]
      %v350 = vld [vmem:[%s325 + $0x50] sm:$0xff]
      %v351 = vld [vmem:[%s325 + $0x58] sm:$0xff]
      %v352 = vld [vmem:[%s325 + $0x60] sm:$0xff]
      %v353 = vld [vmem:[%s325 + $0x68] sm:$0xff]
      %v354 = vld [vmem:[%s325 + $0x70] sm:$0xff]
      %v355 = vld [vmem:[%s325 + $0x78] sm:$0xff]
      %v356 = vld [vmem:[%s328] sm:$0x1]
      %v358 = vlaneseq
      %v359 = vshrl.u32 %v358, 7
      %v360 = vsub.s32 0, %v359
      %v361 = vrot.slane %v356, %v360
      %363 = vmatprep.subr.mxu0 0.0
      %364 = vmatpush1.msra.mxu0 %v355
      %365 = vmatprep.subr.mxu0 0.0
      %366 = vmatpush1.msra.mxu0 %v354
      %367 = vmatprep.subr.mxu0 0.0
      %368 = vmatpush1.msra.mxu0 %v353
      %369 = vmatprep.subr.mxu0 0.0
      %370 = vmatpush1.msra.mxu0 %v352
      %371 = vmatprep.subr.mxu0 0.0
      %372 = vmatpush1.msra.mxu0 %v351
      %373 = vmatprep.subr.mxu0 0.0
      %374 = vmatpush1.msra.mxu0 %v350
      %375 = vmatprep.subr.mxu0 0.0
      %376 = vmatpush1.msra.mxu0 %v349
      %377 = vmatprep.subr.mxu0 0.0
      %378 = vmatpush1.msra.mxu0 %v348
      %379 = vmatprep.subr.mxu0 0.0
      %380 = vmatpush1.msra.mxu0 %v347
      %381 = vmatprep.subr.mxu0 0.0
      %382 = vmatpush1.msra.mxu0 %v346
      %383 = vmatprep.subr.mxu0 0.0
      %384 = vmatpush1.msra.mxu0 %v345
      %385 = vmatprep.subr.mxu0 0.0
      %386 = vmatpush1.msra.mxu0 %v344
      %387 = vmatprep.subr.mxu0 0.0
      %388 = vmatpush1.msra.mxu0 %v343
      %389 = vmatprep.subr.mxu0 0.0
      %390 = vmatpush1.msra.mxu0 %v342
      %391 = vmatprep.subr.mxu0 0.0
      %392 = vmatpush1.msra.mxu0 %v341
      %393 = vmatprep.subr.mxu0 0.0
      %394 = vmatpush1.msra.mxu0 %v340
      %395 = vmatprep.subr.mxu0 0.0
      %396 = vmatpush2.msra.mxu0 0.0
      %397 = vmatprep.subr.mxu0 0.0
      %398 = vmatpush2.msra.mxu0 0.0
      %399 = vmatprep.subr.mxu0 0.0
      %400 = vmatpush2.msra.mxu0 0.0
      %401 = vmatprep.subr.mxu0 0.0
      %402 = vmatpush2.msra.mxu0 0.0
      %403 = vmatprep.subr.mxu0 0.0
      %404 = vmatpush2.msra.mxu0 0.0
      %405 = vmatprep.subr.mxu0 0.0
      %406 = vmatpush2.msra.mxu0 0.0
      %407 = vmatprep.subr.mxu0 0.0
      %408 = vmatpush2.msra.mxu0 0.0
      %409 = vmatprep.subr.mxu0 0.0
      %410 = vmatpush2.msra.mxu0 0.0
      %411 = vmatprep.subr.mxu0 0.0
      %412 = vmatpush2.msra.mxu0 0.0
      %413 = vmatprep.subr.mxu0 0.0
      %414 = vmatpush2.msra.mxu0 0.0
      %415 = vmatprep.subr.mxu0 0.0
      %416 = vmatpush2.msra.mxu0 0.0
      %417 = vmatprep.subr.mxu0 0.0
      %418 = vmatpush2.msra.mxu0 0.0
      %419 = vmatprep.subr.mxu0 0.0
      %420 = vmatpush2.msra.mxu0 0.0
      %421 = vmatprep.subr.mxu0 0.0
      %422 = vmatpush2.msra.mxu0 0.0
      %423 = vmatprep.subr.mxu0 0.0
      %424 = vmatpush2.msra.mxu0 0.0
      %425 = vmatprep.subr.mxu0 0.0
      %426 = vmatpush2.msra.mxu0 0.0
      %427 = vmatprep.mubr.f32.mxu0 0.0
      %428 = vmatmul.mubr.f32.gmra.mxu0 %v339
      %v429 = vpop.f32.mrf.mxu0
      %v430 = vadd.f32 %v361, %v429
      %v431 = vpop.f32.mrf.mxu0
      %432 = vdwg.mxu0
      %v433 = vmax.f32 %v430, 0.0
      %v434 = vld [vmem:[%s333] sm:$0xff]
      %v435 = vld [vmem:[%s333 + $0x8] sm:$0xff]
      %v436 = vld [vmem:[%s333 + $0x10] sm:$0xff]
      %v437 = vld [vmem:[%s333 + $0x18] sm:$0xff]
      %v438 = vld [vmem:[%s333 + $0x20] sm:$0xff]
      %v439 = vld [vmem:[%s333 + $0x28] sm:$0xff]
      %v440 = vld [vmem:[%s333 + $0x30] sm:$0xff]
      %v441 = vld [vmem:[%s333 + $0x38] sm:$0xff]
      %v442 = vld [vmem:[%s333 + $0x40] sm:$0xff]
      %v443 = vld [vmem:[%s333 + $0x48] sm:$0xff]
      %v444 = vld [vmem:[%s333 + $0x50] sm:$0xff]
      %v445 = vld [vmem:[%s333 + $0x58] sm:$0xff]
      %v446 = vld [vmem:[%s333 + $0x60] sm:$0xff]
      %v447 = vld [vmem:[%s333 + $0x68] sm:$0xff]
      %v448 = vld [vmem:[%s333 + $0x70] sm:$0xff]
      %v449 = vld [vmem:[%s333 + $0x78] sm:$0xff]
      %450 = vmatprep.subr.mxu0 0.0
      %451 = vmatpush1.msra.mxu0 %v449
      %452 = vmatprep.subr.mxu0 0.0
      %453 = vmatpush1.msra.mxu0 %v448
      %454 = vmatprep.subr.mxu0 0.0
      %455 = vmatpush1.msra.mxu0 %v447
      %456 = vmatprep.subr.mxu0 0.0
      %457 = vmatpush1.msra.mxu0 %v446
      %458 = vmatprep.subr.mxu0 0.0
      %459 = vmatpush1.msra.mxu0 %v445
      %460 = vmatprep.subr.mxu0 0.0
      %461 = vmatpush1.msra.mxu0 %v444
      %462 = vmatprep.subr.mxu0 0.0
      %463 = vmatpush1.msra.mxu0 %v443
      %464 = vmatprep.subr.mxu0 0.0
      %465 = vmatpush1.msra.mxu0 %v442
      %466 = vmatprep.subr.mxu0 0.0
      %467 = vmatpush1.msra.mxu0 %v441
      %468 = vmatprep.subr.mxu0 0.0
      %469 = vmatpush1.msra.mxu0 %v440
      %470 = vmatprep.subr.mxu0 0.0
      %471 = vmatpush1.msra.mxu0 %v439
      %472 = vmatprep.subr.mxu0 0.0
      %473 = vmatpush1.msra.mxu0 %v438
      %474 = vmatprep.subr.mxu0 0.0
      %475 = vmatpush1.msra.mxu0 %v437
      %476 = vmatprep.subr.mxu0 0.0
      %477 = vmatpush1.msra.mxu0 %v436
      %478 = vmatprep.subr.mxu0 0.0
      %479 = vmatpush1.msra.mxu0 %v435
      %480 = vmatprep.subr.mxu0 0.0
      %481 = vmatpush1.msra.mxu0 %v434
      %482 = vmatprep.subr.mxu0 0.0
      %483 = vmatpush2.msra.mxu0 0.0
      %484 = vmatprep.subr.mxu0 0.0
      %485 = vmatpush2.msra.mxu0 0.0
      %486 = vmatprep.subr.mxu0 0.0
      %487 = vmatpush2.msra.mxu0 0.0
      %488 = vmatprep.subr.mxu0 0.0
      %489 = vmatpush2.msra.mxu0 0.0
      %490 = vmatprep.subr.mxu0 0.0
      %491 = vmatpush2.msra.mxu0 0.0
      %492 = vmatprep.subr.mxu0 0.0
      %493 = vmatpush2.msra.mxu0 0.0
      %494 = vmatprep.subr.mxu0 0.0
      %495 = vmatpush2.msra.mxu0 0.0
      %496 = vmatprep.subr.mxu0 0.0
      %497 = vmatpush2.msra.mxu0 0.0
      %498 = vmatprep.subr.mxu0 0.0
      %499 = vmatpush2.msra.mxu0 0.0
      %500 = vmatprep.subr.mxu0 0.0
      %501 = vmatpush2.msra.mxu0 0.0
      %502 = vmatprep.subr.mxu0 0.0
      %503 = vmatpush2.msra.mxu0 0.0
      %504 = vmatprep.subr.mxu0 0.0
      %505 = vmatpush2.msra.mxu0 0.0
      %506 = vmatprep.subr.mxu0 0.0
      %507 = vmatpush2.msra.mxu0 0.0
      %508 = vmatprep.subr.mxu0 0.0
      %509 = vmatpush2.msra.mxu0 0.0
      %510 = vmatprep.subr.mxu0 0.0
      %511 = vmatpush2.msra.mxu0 0.0
      %512 = vmatprep.subr.mxu0 0.0
      %513 = vmatpush2.msra.mxu0 0.0
      %514 = vmatprep.mubr.f32.mxu0 0.0
      %515 = vmatmul.mubr.f32.gmra.mxu0 %v433
      %v516 = vpop.f32.mrf.mxu0
      %v517 = vadd.f32 0.0, %v516
      %v518 = vpop.f32.mrf.mxu0
      %519 = vdwg.mxu0
      %p520 = scmp.eq.s32.totalorder %s23, 0
      // Predicated region
      $region49: #{_ffn_impl.1} parent=47 // pred_check
        %p521 = pneg %p520
      $region50: #{_ffn_impl.1} parent=47 // pred_check_branch
        %523 = sbr.rel (%p521) target = $region52
      $region51: #{_ffn_impl.1} parent=47 // pred_region
        %524 = vst [vmem:[#allocation2] sm:$0xff] %v517
      $region52: #{_ffn_impl.1} parent=47 // pred_fallthru
        _
      %p525 = scmp.gt.s32.totalorder %s23, 0
      // Predicated region
      $region53: #{_ffn_impl.1} parent=47 // pred_check
        %p526 = pneg %p525
      $region54: #{_ffn_impl.1} parent=47 // pred_check_branch
        %528 = sbr.rel (%p526) target = $region56
      $region55: #{_ffn_impl.1} parent=47 // pred_region
        %v529 = vld [vmem:[#allocation2] sm:$0xff]
        %v530 = vadd.f32 %v529, %v517
        %531 = vst [vmem:[#allocation2] sm:$0xff] %v530
      $region56: #{_ffn_impl.1} parent=47 // pred_fallthru
        _
      // Predicated region
      $region57: #{_ffn_impl.1} parent=47 // pred_check
        %p532 = pneg %p520
      $region58: #{_ffn_impl.1} parent=47 // pred_check_branch
        %534 = sbr.rel (%p532) target = $region60
      $region59: #{_ffn_impl.1} parent=47 // pred_region
        %v535 = vld [vmem:[#allocation2] sm:$0xff]
        %v536 = vld [vmem:[%s4] sm:$0x1]
        %v538 = vlaneseq
        %v539 = vshrl.u32 %v538, 7
        %v540 = vsub.s32 0, %v539
        %v541 = vrot.slane %v536, %v540
        %v543 = vadd.f32 %v535, %v541
        %v544 = vadd.f32 %v543, %v339
        %545 = vadd.xlane.f32.xlu0 %v544
        %v546 = vpop.xlane.xlu0 %545
        %v547 = vmul.f32 %v546, 0.03125
        %v548 = vmul.f32 %v544, %v544
        %549 = vadd.xlane.f32.xlu0 %v548
        %v550 = vpop.xlane.xlu0 %549
        %v551 = vmul.f32 %v550, 0.03125
        %v552 = vmul.f32 %v547, %v547
        %v553 = vsub.f32 %v551, %v552
        %v554 = vmax.f32 %v553, 0.0
        %v555 = vsub.f32 %v544, %v547
        %v556 = vadd.f32 %v554, 1e-05
        %v557 = vrsqrt.pop %v556
        %v558 = vmul.f32 %v555, %v557
        %v559 = vld [vmem:[%s5] sm:$0x1]
        %v561 = vlaneseq
        %v562 = vshrl.u32 %v561, 7
        %v563 = vsub.s32 0, %v562
        %v564 = vrot.slane %v559, %v563
        %v566 = vmul.f32 %v558, %v564
        %v567 = vld [vmem:[%s6] sm:$0x1]
        %v569 = vlaneseq
        %v570 = vshrl.u32 %v569, 7
        %v571 = vsub.s32 0, %v570
        %v572 = vrot.slane %v567, %v571
        %v574 = vadd.f32 %v566, %v572
        %575 = vst [vmem:[%s338] sm:$0xff] %v574
      $region60: #{_ffn_impl.1} parent=47 // pred_fallthru
        _
      %p576 = scmp.lt.s32.totalorder %s22, 1
      %s577 = scalar_select %p576, %s22, 1
      %s578 = smul.addr %s577, 8
      %s579 = scalar_lea.vmem %s7, %s578
      // Predicated region
      $region61: #{_ffn_impl.1} parent=47 // pred_check
        %p580 = pneg %p215
      $region62: #{_ffn_impl.1} parent=47 // pred_check_branch
        %582 = sbr.rel (%p580) target = $region64
      $region63: #{_ffn_impl.1} parent=47 // pred_region
        _
      $region64: #{_ffn_impl.1} parent=47 // pred_fallthru
        _
    $region48: #{_ffn_impl.1} parent=5 // pred_fallthru
      _
    %p583 = scmp.le.s32.totalorder 2, %s13
    // Predicated region
    $region65: #{_ffn_impl.1} parent=5 // pred_check
      %p584 = pneg %p583
    $region66: #{_ffn_impl.1} parent=5 // pred_check_branch
      %586 = sbr.rel (%p584) target = $region68
    $region67: #{_ffn_impl.1} parent=5 // pred_region
      %s587 = ssub.s32 %s13, 2
      // Predicated region
      $region69: #{_ffn_impl.1} parent=67 // pred_check
        %p588 = pneg %p221
      $region70: #{_ffn_impl.1} parent=67 // pred_check_branch
        %590 = sbr.rel (%p588) target = $region72
      $region71: #{_ffn_impl.1} parent=67 // pred_region
        %p591 = scmp.lt.s32.totalorder %s24, 1
        %s592 = scalar_select %p591, %s24, 1
        %s593 = smul.addr %s592, 8
        %s594 = scalar_lea.vmem %s7, %s593
      $region72: #{_ffn_impl.1} parent=67 // pred_fallthru
        _
    $region68: #{_ffn_impl.1} parent=5 // pred_fallthru
      _
  $region6: #{_ffn_impl.1} parent=0 // loop_footer
    %s17 = sadd.s32 1, %s13
  $region7: #{_ffn_impl.1} parent=0 // loop_footer_branch
    %12 = sbr.rel target = $region3
  $region8: #{_ffn_impl.1} parent=0 // loop_exit
    _

</llo_original>
